<compile_context>
chip_gen: v7x
topology: tpu7x:2x2x1
jax: 0.10.0
libtpu: 0.0.40
codegen_flags: <defaults>
</compile_context>

<pallas_src>
import jax
import jax.numpy as jnp
from jax import lax
from jax.experimental import pallas as pl
from jax.experimental.pallas import tpu as pltpu

EPS = 1e-5  # torch.nn.InstanceNorm1d default eps


# ---------------------------------------------------------------------------
# Hardware parameters (generation-aware sizing)
# ---------------------------------------------------------------------------
def _hw_params():
    kind = ""
    try:
        kind = jax.devices()[0].device_kind.lower()
    except Exception:
        pass

    is_v7 = "v7" in kind
    is_v6 = "v6" in kind

    default_phys_vmem = (64 << 20) if is_v7 else (128 << 20)
    try:
        info = pltpu.get_tpu_info()
        phys_vmem = int(getattr(info, "vmem_capacity_bytes", 0) or 0) or default_phys_vmem
    except Exception:
        phys_vmem = default_phys_vmem

    # Per-array block-size target (HBM-bound kernel: amortize ~0.35us/step overhead).
    if is_v7:
        target_bytes = 8 << 20
    elif is_v6:
        target_bytes = 4 << 20
    else:
        target_bytes = 2 << 20

    # Raise the scoped-VMEM limit to match what we size blocks for, with headroom.
    vmem_limit = min((phys_vmem * 3) // 4, 64 << 20)   # 48 MiB on v7x, 64 MiB v5e/v6e
    vmem_budget = vmem_limit - (4 << 20)               # headroom for compiler internals

    num_cores = 2 if is_v7 else 1                      # TensorCores per chip
    return {
        "num_cores": num_cores,
        "target_bytes": target_bytes,
        "vmem_limit": int(vmem_limit),
        "vmem_budget": int(vmem_budget),
    }


# ---------------------------------------------------------------------------
# Primary path: one grid step handles TB whole batch instances (full P resident)
# ---------------------------------------------------------------------------
def add_norm_kernel(x1_ref, x2_ref, gamma_ref, beta_ref, out_ref, x_scr):
    # x1_ref / x2_ref / out_ref: (TB, P, E) block; gamma/beta: (1, 1, E) resident.
    # x_scr: explicit fp32 working copy of the block (deterministic VMEM footprint).
    x_scr[...] = x1_ref[...].astype(jnp.float32) + x2_ref[...].astype(jnp.float32)

    inv_p = jnp.float32(1.0 / x_scr.shape[1])
    mean = jnp.sum(x_scr[...], axis=1, keepdims=True) * inv_p        # (TB, 1, E)

    # Two-pass variance: center first (numerically robust), then square-reduce.
    x_scr[...] = x_scr[...] - mean
    var = jnp.sum(x_scr[...] * x_scr[...], axis=1, keepdims=True) * inv_p
    inv_std = lax.rsqrt(var + EPS)                                   # EUP slot

    scale = gamma_ref[...].astype(jnp.float32) * inv_std             # (TB, 1, E)
    out_ref[...] = (x_scr[...] * scale
                    + beta_ref[...].astype(jnp.float32)).astype(out_ref.dtype)


def _pick_tb(B, P, E, itemsize, *, target_bytes, vmem_budget, num_cores):
    """Largest batch tile TB such that blocks are big but VMEM-safe; on 2-TC chips
    prefer an even grid length for balanced megacore sharding."""
    block_bytes_per_batch = P * E * itemsize
    # Live VMEM per batch instance in a block:
    #   2 inputs + 1 output, double-buffered   -> 6 * itemsize bytes / element
    #   fp32 scratch + transient fp32 temps    -> ~16 bytes / element
    live_per_batch = P * E * (6 * itemsize + 16)

    cap = max(1, min(vmem_budget // max(1, live_per_batch),
                     max(1, target_bytes // max(1, block_bytes_per_batch))))
    cap = min(cap, B)

    divisors = [d for d in range(cap, 0, -1) if B % d == 0]
    if num_cores >= 2 and B >= num_cores:
        for d in divisors:                       # balanced: grid_b divisible by #cores
            if (B // d) % num_cores == 0:
                return d
        for d in divisors:                       # at least one step per core
            if (B // d) >= num_cores:
                return d
    return divisors[0]


def _add_and_normalize_single_pass(x1, x2, gamma3d, beta3d, *, hw):
    B, P, E = x1.shape
    itemsize = jnp.dtype(x1.dtype).itemsize
    tb = _pick_tb(B, P, E, itemsize,
                  target_bytes=hw["target_bytes"],
                  vmem_budget=hw["vmem_budget"],
                  num_cores=hw["num_cores"])
    grid_b = B // tb

    cost = pl.CostEstimate(
        flops=7 * B * P * E,
        transcendentals=B * E,
        bytes_accessed=3 * B * P * E * itemsize + 2 * E * 4,
    )

    return pl.pallas_call(
        add_norm_kernel,
        out_shape=jax.ShapeDtypeStruct((B, P, E), x1.dtype),
        grid_spec=pltpu.PrefetchScalarGridSpec(
            num_scalar_prefetch=0,
            grid=(grid_b,),
            in_specs=[
                pl.BlockSpec((tb, P, E), lambda b: (b, 0, 0)),
                pl.BlockSpec((tb, P, E), lambda b: (b, 0, 0)),
                pl.BlockSpec((1, 1, E), lambda b: (0, 0, 0)),
                pl.BlockSpec((1, 1, E), lambda b: (0, 0, 0)),
            ],
            out_specs=pl.BlockSpec((tb, P, E), lambda b: (b, 0, 0)),
            scratch_shapes=[pltpu.VMEM((tb, P, E), jnp.float32)],
        ),
        compiler_params=pltpu.CompilerParams(
            dimension_semantics=("parallel",),
            vmem_limit_bytes=hw["vmem_limit"],
        ),
        cost_estimate=cost,
    )(x1, x2, gamma3d, beta3d)


# ---------------------------------------------------------------------------
# Fallback path for large P: tile the problem axis.
#   Pass 1 accumulates per-(batch, channel) sum / sum-of-squares in VMEM scratch
#   and finalizes fused affine (scale, shift). Pass 2 applies them.
# ---------------------------------------------------------------------------
def _make_stats_kernel(P_total):
    def stats_kernel(x1_ref, x2_ref, gamma_ref, beta_ref,
                     scale_ref, shift_ref, sum_scr, sq_scr):
        p = pl.program_id(1)

        @pl.when(p == 0)
        def _():
            sum_scr[...] = jnp.zeros_like(sum_scr)
            sq_scr[...] = jnp.zeros_like(sq_scr)

        x = x1_ref[...].astype(jnp.float32) + x2_ref[...].astype(jnp.float32)
        sum_scr[...] += jnp.sum(x, axis=1, keepdims=True)
        sq_scr[...] += jnp.sum(x * x, axis=1, keepdims=True)

        @pl.when(p == pl.num_programs(1) - 1)
        def _():
            inv_p = jnp.float32(1.0 / P_total)
            mean = sum_scr[...] * inv_p
            var = jnp.maximum(sq_scr[...] * inv_p - mean * mean, 0.0)
            inv_std = lax.rsqrt(var + EPS)
            scale = gamma_ref[...].astype(jnp.float32) * inv_std
            scale_ref[...] = scale
            shift_ref[...] = beta_ref[...].astype(jnp.float32) - mean * scale

    return stats_kernel


def _apply_kernel(x1_ref, x2_ref, scale_ref, shift_ref, out_ref):
    x = x1_ref[...].astype(jnp.float32) + x2_ref[...].astype(jnp.float32)
    out_ref[...] = (x * scale_ref[...] + shift_ref[...]).astype(out_ref.dtype)


def _pick_tp(P, E, itemsize, *, target_bytes, vmem_budget):
    """Problem-axis tile: divisor of P that is a multiple of 8 (or P itself),
    as large as fits the block-size target and VMEM budget."""
    bytes_per_elem = 6 * itemsize + 8   # pipelined in/out blocks + transient fp32 temps
    cap = max(1, min(target_bytes // max(1, E * itemsize),
                     vmem_budget // max(1, E * bytes_per_elem)))
    cap = min(cap, P)
    valid = [d for d in range(P, 0, -1) if P % d == 0 and (d % 8 == 0 or d == P)]
    for d in valid:
        if d <= cap:
            return d
    return valid[-1]


def _add_and_normalize_two_pass(x1, x2, gamma3d, beta3d, *, tp, hw):
    B, P, E = x1.shape
    itemsize = jnp.dtype(x1.dtype).itemsize
    grid_p = P // tp

    stats_cost = pl.CostEstimate(
        flops=4 * B * P * E,
        transcendentals=B * E,
        bytes_accessed=2 * B * P * E * itemsize + 2 * B * E * 4 + 2 * E * 4,
    )
    scale, shift = pl.pallas_call(
        _make_stats_kernel(P),
        out_shape=(jax.ShapeDtypeStruct((B, 1, E), jnp.float32),
                   jax.ShapeDtypeStruct((B, 1, E), jnp.float32)),
        grid_spec=pltpu.PrefetchScalarGridSpec(
            num_scalar_prefetch=0,
            grid=(B, grid_p),
            in_specs=[
                pl.BlockSpec((1, tp, E), lambda b, p: (b, p, 0)),
                pl.BlockSpec((1, tp, E), lambda b, p: (b, p, 0)),
                pl.BlockSpec((1, 1, E), lambda b, p: (0, 0, 0)),
                pl.BlockSpec((1, 1, E), lambda b, p: (0, 0, 0)),
            ],
            out_specs=[
                pl.BlockSpec((1, 1, E), lambda b, p: (b, 0, 0)),
                pl.BlockSpec((1, 1, E), lambda b, p: (b, 0, 0)),
            ],
            scratch_shapes=[pltpu.VMEM((1, 1, E), jnp.float32),
                            pltpu.VMEM((1, 1, E), jnp.float32)],
        ),
        compiler_params=pltpu.CompilerParams(
            dimension_semantics=("parallel", "arbitrary"),
            vmem_limit_bytes=hw["vmem_limit"],
        ),
        cost_estimate=stats_cost,
    )(x1, x2, gamma3d, beta3d)

    apply_cost = pl.CostEstimate(
        flops=3 * B * P * E,
        transcendentals=0,
        bytes_accessed=3 * B * P * E * itemsize + 2 * B * E * 4,
    )
    return pl.pallas_call(
        _apply_kernel,
        out_shape=jax.ShapeDtypeStruct((B, P, E), x1.dtype),
        grid_spec=pltpu.PrefetchScalarGridSpec(
            num_scalar_prefetch=0,
            grid=(B, grid_p),
            in_specs=[
                pl.BlockSpec((1, tp, E), lambda b, p: (b, p, 0)),
                pl.BlockSpec((1, tp, E), lambda b, p: (b, p, 0)),
                pl.BlockSpec((1, 1, E), lambda b, p: (b, 0, 0)),
                pl.BlockSpec((1, 1, E), lambda b, p: (b, 0, 0)),
            ],
            out_specs=pl.BlockSpec((1, tp, E), lambda b, p: (b, p, 0)),
        ),
        compiler_params=pltpu.CompilerParams(
            dimension_semantics=("parallel", "parallel"),
            vmem_limit_bytes=hw["vmem_limit"],
        ),
        cost_estimate=apply_cost,
    )(x1, x2, scale, shift)


# ---------------------------------------------------------------------------
# Public entry point
# ---------------------------------------------------------------------------
def add_and_normalize(x1, x2, gamma, beta, *, _force_two_pass=False, _tile_p_override=None):
    """x1, x2: (B, P, E); gamma, beta: (E,). Returns (B, P, E)."""
    B, P, E = x1.shape
    itemsize = jnp.dtype(x1.dtype).itemsize
    hw = _hw_params()

    gamma3d = gamma.reshape(1, 1, E)
    beta3d = beta.reshape(1, 1, E)

    # Would one batch instance (with fp32 working copy + temps) fit the VMEM budget?
    live_per_batch = P * E * (6 * itemsize + 16)
    if _force_two_pass or live_per_batch > hw["vmem_budget"]:
        tp = _tile_p_override or _pick_tp(P, E, itemsize,
                                          target_bytes=hw["target_bytes"],
                                          vmem_budget=hw["vmem_budget"])
        return _add_and_normalize_two_pass(x1, x2, gamma3d, beta3d, tp=tp, hw=hw)

    return _add_and_normalize_single_pass(x1, x2, gamma3d, beta3d, hw=hw)


def reference(x1, x2, gamma, beta):
    added = x1 + x2                                              # (B, P, E)
    mean = jnp.mean(added, axis=1, keepdims=True)                # over problem axis
    var = jnp.mean((added - mean) ** 2, axis=1, keepdims=True)   # biased variance
    normalized = (added - mean) / jnp.sqrt(var + EPS)
    return normalized * gamma.reshape(1, 1, -1) + beta.reshape(1, 1, -1)


if __name__ == "__main__":
    key = jax.random.PRNGKey(0)
    k1, k2, k3, k4 = jax.random.split(key, 4)

    # --- Primary (single-pass) path: embedding_dim=128 is the model's default ---
    B, P, E = 4, 8, 128
    x1 = jax.random.normal(k1, (B, P, E), dtype=jnp.float32)
    x2 = jax.random.normal(k2, (B, P, E), dtype=jnp.float32)
    gamma = 1.0 + 0.1 * jax.random.normal(k3, (E,), dtype=jnp.float32)
    beta = 0.1 * jax.random.normal(k4, (E,), dtype=jnp.float32)

    out = jax.block_until_ready(add_and_normalize(x1, x2, gamma, beta))
    ref = reference(x1, x2, gamma, beta)
    assert out.shape == (B, P, E)
    assert jnp.allclose(out, ref, atol=1e-4, rtol=1e-4), "single-pass mismatch vs reference"

    # --- Fallback (P-tiled, two-pass) path, forced at small shapes for validation ---
    B2, P2 = 2, 16
    y1 = jax.random.normal(k3, (B2, P2, E), dtype=jnp.float32)
    y2 = jax.random.normal(k4, (B2, P2, E), dtype=jnp.float32)
    out2 = jax.block_until_ready(
        add_and_normalize(y1, y2, gamma, beta, _force_two_pass=True, _tile_p_override=8))
    ref2 = reference(y1, y2, gamma, beta)
    assert out2.shape == (B2, P2, E)
    assert jnp.allclose(out2, ref2, atol=1e-4, rtol=1e-4), "two-pass mismatch vs reference"

    print("KERNEL_OK")
</pallas_src>

<mosaic_0001>
module attributes {stable_mosaic.version = 11 : i64} {
  func.func @add_norm_kernel(%arg0: i32, %arg1: memref<4x8x128xf32, #tpu.memory_space<vmem>>, %arg2: memref<4x8x128xf32, #tpu.memory_space<vmem>>, %arg3: memref<1x1x128xf32, #tpu.memory_space<vmem>>, %arg4: memref<1x1x128xf32, #tpu.memory_space<vmem>>, %arg5: memref<4x8x128xf32, #tpu.memory_space<vmem>>, %arg6: memref<4x8x128xf32, #tpu.memory_space<vmem>>) attributes {dimension_semantics = [#tpu.dimension_semantics<parallel>], iteration_bounds = array<i64: 1>, scalar_prefetch = 0 : i64, scratch_operands = 1 : i64, tpu.core_type = #tpu.core_type<tc>, window_params = [{transform_indices = @transform_0, window_bounds = array<i64: 4, 8, 128>}, {transform_indices = @transform_1, window_bounds = array<i64: 4, 8, 128>}, {pipeline_mode = #tpu.pipeline_mode<synchronous>, transform_indices = @transform_2, window_bounds = array<i64: 1, 1, 128>}, {pipeline_mode = #tpu.pipeline_mode<synchronous>, transform_indices = @transform_3, window_bounds = array<i64: 1, 1, 128>}, {transform_indices = @transform_4, window_bounds = array<i64: 4, 8, 128>}]} {
    %c0 = arith.constant 0 : index
    %c0_0 = arith.constant 0 : index
    %c0_1 = arith.constant 0 : index
    %0 = vector.load %arg1[%c0, %c0_0, %c0_1] : memref<4x8x128xf32, #tpu.memory_space<vmem>>, vector<4x8x128xf32>
    %c0_2 = arith.constant 0 : index
    %c0_3 = arith.constant 0 : index
    %c0_4 = arith.constant 0 : index
    %1 = vector.load %arg2[%c0_2, %c0_3, %c0_4] : memref<4x8x128xf32, #tpu.memory_space<vmem>>, vector<4x8x128xf32>
    %2 = arith.addf %0, %1 : vector<4x8x128xf32>
    %c0_5 = arith.constant 0 : index
    %c0_6 = arith.constant 0 : index
    %c0_7 = arith.constant 0 : index
    %3 = vector.load %arg6[%c0_5, %c0_6, %c0_7] : memref<4x8x128xf32, #tpu.memory_space<vmem>>, vector<4x8x128xf32>
    tpu.vector_store %arg6[%c0_5, %c0_6, %c0_7], %2 {strides = array<i32>} : memref<4x8x128xf32, #tpu.memory_space<vmem>>, vector<4x8x128xf32>,
    %c0_8 = arith.constant 0 : index
    %c0_9 = arith.constant 0 : index
    %c0_10 = arith.constant 0 : index
    %4 = vector.load %arg6[%c0_8, %c0_9, %c0_10] : memref<4x8x128xf32, #tpu.memory_space<vmem>>, vector<4x8x128xf32>
    %cst = arith.constant dense<0.000000e+00> : vector<4x128xf32>
    %5 = vector.multi_reduction <add>, %4, %cst [1] : vector<4x8x128xf32> to vector<4x128xf32>
    %6 = vector.shape_cast %5 : vector<4x128xf32> to vector<4x1x128xf32>
    %cst_11 = arith.constant 1.250000e-01 : f32
    %7 = vector.broadcast %cst_11 : f32 to vector<4x1x128xf32>
    %8 = arith.mulf %6, %7 : vector<4x1x128xf32>
    %c0_12 = arith.constant 0 : index
    %c0_13 = arith.constant 0 : index
    %c0_14 = arith.constant 0 : index
    %9 = vector.load %arg6[%c0_12, %c0_13, %c0_14] : memref<4x8x128xf32, #tpu.memory_space<vmem>>, vector<4x8x128xf32>
    %10 = vector.broadcast %8 : vector<4x1x128xf32> to vector<4x8x128xf32>
    %11 = arith.subf %9, %10 : vector<4x8x128xf32>
    %c0_15 = arith.constant 0 : index
    %c0_16 = arith.constant 0 : index
    %c0_17 = arith.constant 0 : index
    %12 = vector.load %arg6[%c0_15, %c0_16, %c0_17] : memref<4x8x128xf32, #tpu.memory_space<vmem>>, vector<4x8x128xf32>
    tpu.vector_store %arg6[%c0_15, %c0_16, %c0_17], %11 {strides = array<i32>} : memref<4x8x128xf32, #tpu.memory_space<vmem>>, vector<4x8x128xf32>,
    %c0_18 = arith.constant 0 : index
    %c0_19 = arith.constant 0 : index
    %c0_20 = arith.constant 0 : index
    %13 = vector.load %arg6[%c0_18, %c0_19, %c0_20] : memref<4x8x128xf32, #tpu.memory_space<vmem>>, vector<4x8x128xf32>
    %c0_21 = arith.constant 0 : index
    %c0_22 = arith.constant 0 : index
    %c0_23 = arith.constant 0 : index
    %14 = vector.load %arg6[%c0_21, %c0_22, %c0_23] : memref<4x8x128xf32, #tpu.memory_space<vmem>>, vector<4x8x128xf32>
    %15 = arith.mulf %13, %14 : vector<4x8x128xf32>
    %cst_24 = arith.constant dense<0.000000e+00> : vector<4x128xf32>
    %16 = vector.multi_reduction <add>, %15, %cst_24 [1] : vector<4x8x128xf32> to vector<4x128xf32>
    %17 = vector.shape_cast %16 : vector<4x128xf32> to vector<4x1x128xf32>
    %cst_25 = arith.constant 1.250000e-01 : f32
    %18 = vector.broadcast %cst_25 : f32 to vector<4x1x128xf32>
    %19 = arith.mulf %17, %18 : vector<4x1x128xf32>
    %cst_26 = arith.constant 9.99999974E-6 : f32
    %20 = vector.broadcast %cst_26 : f32 to vector<4x1x128xf32>
    %21 = arith.addf %19, %20 : vector<4x1x128xf32>
    %22 = math.rsqrt %21 : vector<4x1x128xf32>
    %c0_27 = arith.constant 0 : index
    %c0_28 = arith.constant 0 : index
    %c0_29 = arith.constant 0 : index
    %23 = vector.load %arg3[%c0_27, %c0_28, %c0_29] : memref<1x1x128xf32, #tpu.memory_space<vmem>>, vector<1x1x128xf32>
    %24 = vector.broadcast %23 : vector<1x1x128xf32> to vector<4x1x128xf32>
    %25 = arith.mulf %24, %22 : vector<4x1x128xf32>
    %c0_30 = arith.constant 0 : index
    %c0_31 = arith.constant 0 : index
    %c0_32 = arith.constant 0 : index
    %26 = vector.load %arg6[%c0_30, %c0_31, %c0_32] : memref<4x8x128xf32, #tpu.memory_space<vmem>>, vector<4x8x128xf32>
    %27 = vector.broadcast %25 : vector<4x1x128xf32> to vector<4x8x128xf32>
    %28 = arith.mulf %26, %27 : vector<4x8x128xf32>
    %c0_33 = arith.constant 0 : index
    %c0_34 = arith.constant 0 : index
    %c0_35 = arith.constant 0 : index
    %29 = vector.load %arg4[%c0_33, %c0_34, %c0_35] : memref<1x1x128xf32, #tpu.memory_space<vmem>>, vector<1x1x128xf32>
    %30 = vector.broadcast %29 : vector<1x1x128xf32> to vector<4x8x128xf32>
    %31 = arith.addf %28, %30 : vector<4x8x128xf32>
    %c0_36 = arith.constant 0 : index
    %c0_37 = arith.constant 0 : index
    %c0_38 = arith.constant 0 : index
    %32 = vector.load %arg5[%c0_36, %c0_37, %c0_38] : memref<4x8x128xf32, #tpu.memory_space<vmem>>, vector<4x8x128xf32>
    tpu.vector_store %arg5[%c0_36, %c0_37, %c0_38], %31 {strides = array<i32>} : memref<4x8x128xf32, #tpu.memory_space<vmem>>, vector<4x8x128xf32>,
    return
  }
  func.func @transform_0(%arg0: i32) -> (i32, i32, i32) {
    %c0_i32 = arith.constant 0 : i32
    %c0_i32_0 = arith.constant 0 : i32
    %c0_i32_1 = arith.constant 0 : i32
    return %arg0, %c0_i32, %c0_i32_0 : i32, i32, i32
  }
  func.func @transform_1(%arg0: i32) -> (i32, i32, i32) {
    %c0_i32 = arith.constant 0 : i32
    %c0_i32_0 = arith.constant 0 : i32
    %c0_i32_1 = arith.constant 0 : i32
    return %arg0, %c0_i32, %c0_i32_0 : i32, i32, i32
  }
  func.func @transform_2(%arg0: i32) -> (i32, i32, i32) {
    %c0_i32 = arith.constant 0 : i32
    %c0_i32_0 = arith.constant 0 : i32
    %c0_i32_1 = arith.constant 0 : i32
    %c0_i32_2 = arith.constant 0 : i32
    return %c0_i32, %c0_i32_0, %c0_i32_1 : i32, i32, i32
  }
  func.func @transform_3(%arg0: i32) -> (i32, i32, i32) {
    %c0_i32 = arith.constant 0 : i32
    %c0_i32_0 = arith.constant 0 : i32
    %c0_i32_1 = arith.constant 0 : i32
    %c0_i32_2 = arith.constant 0 : i32
    return %c0_i32, %c0_i32_0, %c0_i32_1 : i32, i32, i32
  }
  func.func @transform_4(%arg0: i32) -> (i32, i32, i32) {
    %c0_i32 = arith.constant 0 : i32
    %c0_i32_0 = arith.constant 0 : i32
    %c0_i32_1 = arith.constant 0 : i32
    return %arg0, %c0_i32, %c0_i32_0 : i32, i32, i32
  }
}

</mosaic_0001>

<llo_original>
// kernel: tpu_custom_call.1
$region0: #{tpu_custom_call.1}
  #allocation0 [shape = 'u32[]', space=smem, size = 0x4, offset = 0x4, fixed_abs, tag = 'smem constant byte address 0x4 - core index']
  #allocation1 [shape = 'u32[144,128]{1,0:T(1,128)}', space=vmem, size = 0x12000, scoped, tag = 'internal scratch']
  #allocation2 [shape = 'f32[4,8,128]{2,1,0:T(8,128)}', space=vmem, size = 0x4000, scoped, tag = 'scratch operand']
  %s0 = inlined_call_operand.hbm [shape: f32[4,8,128], index: 0, kind: input, shape index: {}]
  %s1 = inlined_call_operand.hbm [shape: f32[4,8,128], index: 1, kind: input, shape index: {}]
  %s2 = inlined_call_operand.hbm [shape: f32[1,1,128], index: 2, kind: input, shape index: {}]
  %s3 = inlined_call_operand.hbm [shape: f32[1,1,128], index: 3, kind: input, shape index: {}]
  %s4 = inlined_call_operand.hbm [shape: f32[4,8,128], index: 4, kind: output, shape index: {}]
  %s5 = sld [smem:[#allocation0]]
  $region42: #{tpu_custom_call.1} parent=0
    _
  %s7 = ssub.s32 1, %s5
  %s8 = scalar_select 0, %s7, %s5
  $region1: #{tpu_custom_call.1} parent=0
    #allocation3 [shape = 'u8[16384]{0}', space=vmem, size = 0x4000, scoped, tag = 'input window, operand 0, single buffered']
    #allocation4 [shape = 's32[1]{0}', space=sflag, size = 0x4, scoped, tag = 'scoped memory for tpu_custom_call.1']
    #allocation5 [shape = 's32[1]{0}', space=sflag, size = 0x4, scoped, tag = 'scoped memory for tpu_custom_call.1']
    #allocation6 [shape = 'u8[16384]{0}', space=vmem, size = 0x4000, scoped, tag = 'input window, operand 1, single buffered']
    #allocation7 [shape = 's32[1]{0}', space=sflag, size = 0x4, scoped, tag = 'scoped memory for tpu_custom_call.1']
    #allocation8 [shape = 'u8[512]{0}', space=vmem, size = 0x400, scoped, tag = 'input window, operand 2, single buffered']
    #allocation9 [shape = 'u8[512]{0}', space=vmem, size = 0x400, scoped, tag = 'input window, operand 3, single buffered']
    #allocation10 [shape = 's32[1]{0}', space=sflag, size = 0x4, scoped, tag = 'scoped memory for tpu_custom_call.1']
    #allocation11 [shape = 'u8[16384]{0}', space=vmem, size = 0x4000, scoped, tag = 'output window, operand 0, single buffered']
    %9 = vsyncpa [#allocation4], 0
    %10 = vsyncpa [#allocation7], 0
    %11 = vsyncpa [#allocation10], 0
    %12 = vsyncpa [#allocation5], 0
    // Predicated region
    $region2: #{tpu_custom_call.1} parent=1 // pred_check
      _
    $region3: #{tpu_custom_call.1} parent=1 // pred_check_branch
      %14 = sbr.rel (0) target = $region5
    $region4: #{tpu_custom_call.1} parent=1 // pred_region
      %s16 = ssub.s32 512, 512
      %17 = vsyncadd [#allocation4], %s16
      %s18 = sshll.u32 [#allocation3], 4
      %s19 = int_to_ptr.vmem [resolvable:$true] %s18
      %24 = dma.hbm_to_vmem [thread:$0]  %s0, 512, %s19, [#allocation4], 128, 128, 8
    $region5: #{tpu_custom_call.1} parent=1 // pred_fallthru
      _
    // Predicated region
    $region6: #{tpu_custom_call.1} parent=1 // pred_check
      _
    $region7: #{tpu_custom_call.1} parent=1 // pred_check_branch
      %26 = sbr.rel (0) target = $region9
    $region8: #{tpu_custom_call.1} parent=1 // pred_region
      %s28 = ssub.s32 512, 512
      %29 = vsyncadd [#allocation7], %s28
      %s30 = sshll.u32 [#allocation6], 4
      %s31 = int_to_ptr.vmem [resolvable:$true] %s30
      %36 = dma.hbm_to_vmem [thread:$0]  %s1, 512, %s31, [#allocation7], 128, 128, 8
    $region9: #{tpu_custom_call.1} parent=1 // pred_fallthru
      _
    // Predicated region
    $region10: #{tpu_custom_call.1} parent=1 // pred_check
      _
    $region11: #{tpu_custom_call.1} parent=1 // pred_check_branch
      %38 = sbr.rel (0) target = $region13
    $region12: #{tpu_custom_call.1} parent=1 // pred_region
      %s40 = ssub.s32 16, 16
      %41 = vsyncadd [#allocation7], %s40
      %s43 = sshll.u32 [#allocation8], 4
      %s44 = int_to_ptr.vmem [resolvable:$true] %s43
      %46 = dma.hbm_to_vmem [thread:$0]  %s2, 16, %s44, [#allocation7]
    $region13: #{tpu_custom_call.1} parent=1 // pred_fallthru
      _
    // Predicated region
    $region14: #{tpu_custom_call.1} parent=1 // pred_check
      _
    $region15: #{tpu_custom_call.1} parent=1 // pred_check_branch
      %48 = sbr.rel (0) target = $region17
    $region16: #{tpu_custom_call.1} parent=1 // pred_region
      %s50 = ssub.s32 16, 16
      %51 = vsyncadd [#allocation10], %s50
      %s53 = sshll.u32 [#allocation9], 4
      %s54 = int_to_ptr.vmem [resolvable:$true] %s53
      %56 = dma.hbm_to_vmem [thread:$0]  %s3, 16, %s54, [#allocation10]
    $region17: #{tpu_custom_call.1} parent=1 // pred_fallthru
      _
    // Predicated region
    $region18: #{tpu_custom_call.1} parent=1 // pred_check
      _
    $region19: #{tpu_custom_call.1} parent=1 // pred_check_branch
      %58 = sbr.rel (0) target = $region21
    $region20: #{tpu_custom_call.1} parent=1 // pred_region
      %59 = dma.done [#allocation4], 512
    $region21: #{tpu_custom_call.1} parent=1 // pred_fallthru
      _
    // Predicated region
    $region22: #{tpu_custom_call.1} parent=1 // pred_check
      _
    $region23: #{tpu_custom_call.1} parent=1 // pred_check_branch
      %61 = sbr.rel (0) target = $region25
    $region24: #{tpu_custom_call.1} parent=1 // pred_region
      %62 = dma.done [#allocation7], 512
    $region25: #{tpu_custom_call.1} parent=1 // pred_fallthru
      _
    // Predicated region
    $region26: #{tpu_custom_call.1} parent=1 // pred_check
      _
    $region27: #{tpu_custom_call.1} parent=1 // pred_check_branch
      %64 = sbr.rel (0) target = $region29
    $region28: #{tpu_custom_call.1} parent=1 // pred_region
      %65 = dma.done [#allocation7], 16
    $region29: #{tpu_custom_call.1} parent=1 // pred_fallthru
      _
    // Predicated region
    $region30: #{tpu_custom_call.1} parent=1 // pred_check
      _
    $region31: #{tpu_custom_call.1} parent=1 // pred_check_branch
      %67 = sbr.rel (0) target = $region33
    $region32: #{tpu_custom_call.1} parent=1 // pred_region
      %68 = dma.done [#allocation10], 16
    $region33: #{tpu_custom_call.1} parent=1 // pred_fallthru
      _
    %v69 = vld [vmem:[#allocation3] sm:$0xff]
    %v70 = vld [vmem:[#allocation3 + $0x8] sm:$0xff]
    %v71 = vld [vmem:[#allocation3 + $0x10] sm:$0xff]
    %v72 = vld [vmem:[#allocation3 + $0x18] sm:$0xff]
    %v73 = vld [vmem:[#allocation6] sm:$0xff]
    %v74 = vld [vmem:[#allocation6 + $0x8] sm:$0xff]
    %v75 = vld [vmem:[#allocation6 + $0x10] sm:$0xff]
    %v76 = vld [vmem:[#allocation6 + $0x18] sm:$0xff]
    %v77 = vadd.f32 %v69, %v73
    %v78 = vadd.f32 %v70, %v74
    %v79 = vadd.f32 %v71, %v75
    %v80 = vadd.f32 %v72, %v76
    %81 = vst [vmem:[#allocation2] sm:$0xff] %v77
    %82 = vst [vmem:[#allocation2 + $0x8] sm:$0xff] %v78
    %83 = vst [vmem:[#allocation2 + $0x10] sm:$0xff] %v79
    %84 = vst [vmem:[#allocation2 + $0x18] sm:$0xff] %v80
    %v85 = vld [vmem:[#allocation2] sm:$0xff]
    %v86 = vld [vmem:[#allocation2 + $0x8] sm:$0xff]
    %v87 = vld [vmem:[#allocation2 + $0x10] sm:$0xff]
    %v88 = vld [vmem:[#allocation2 + $0x18] sm:$0xff]
    %v89 = vrot.slane %v85, 4
    %v90 = vadd.f32 %v85, %v89
    %v91 = vrot.slane %v90, 2
    %v92 = vadd.f32 %v90, %v91
    %v93 = vrot.slane %v92, 1
    %v94 = vadd.f32 %v92, %v93
    %v95 = vrot.slane %v86, 4
    %v96 = vadd.f32 %v86, %v95
    %v97 = vrot.slane %v96, 2
    %v98 = vadd.f32 %v96, %v97
    %v99 = vrot.slane %v98, 1
    %v100 = vadd.f32 %v98, %v99
    %v101 = vrot.slane %v87, 4
    %v102 = vadd.f32 %v87, %v101
    %v103 = vrot.slane %v102, 2
    %v104 = vadd.f32 %v102, %v103
    %v105 = vrot.slane %v104, 1
    %v106 = vadd.f32 %v104, %v105
    %v107 = vrot.slane %v88, 4
    %v108 = vadd.f32 %v88, %v107
    %v109 = vrot.slane %v108, 2
    %v110 = vadd.f32 %v108, %v109
    %v111 = vrot.slane %v110, 1
    %v112 = vadd.f32 %v110, %v111
    %v113 = vmul.f32 %v94, 0.125
    %v114 = vmul.f32 %v100, 0.125
    %v115 = vmul.f32 %v106, 0.125
    %v116 = vmul.f32 %v112, 0.125
    %v117 = vsub.f32 %v85, %v113
    %v118 = vsub.f32 %v86, %v114
    %v119 = vsub.f32 %v87, %v115
    %v120 = vsub.f32 %v88, %v116
    %121 = vst [vmem:[#allocation2] sm:$0xff] %v117
    %122 = vst [vmem:[#allocation2 + $0x8] sm:$0xff] %v118
    %123 = vst [vmem:[#allocation2 + $0x10] sm:$0xff] %v119
    %124 = vst [vmem:[#allocation2 + $0x18] sm:$0xff] %v120
    %v125 = vld [vmem:[#allocation2] sm:$0xff]
    %v126 = vld [vmem:[#allocation2 + $0x8] sm:$0xff]
    %v127 = vld [vmem:[#allocation2 + $0x10] sm:$0xff]
    %v128 = vld [vmem:[#allocation2 + $0x18] sm:$0xff]
    %v129 = vmul.f32 %v125, %v125
    %v130 = vmul.f32 %v126, %v126
    %v131 = vmul.f32 %v127, %v127
    %v132 = vmul.f32 %v128, %v128
    %v133 = vrot.slane %v129, 4
    %v134 = vadd.f32 %v129, %v133
    %v135 = vrot.slane %v134, 2
    %v136 = vadd.f32 %v134, %v135
    %v137 = vrot.slane %v136, 1
    %v138 = vadd.f32 %v136, %v137
    %v139 = vrot.slane %v130, 4
    %v140 = vadd.f32 %v130, %v139
    %v141 = vrot.slane %v140, 2
    %v142 = vadd.f32 %v140, %v141
    %v143 = vrot.slane %v142, 1
    %v144 = vadd.f32 %v142, %v143
    %v145 = vrot.slane %v131, 4
    %v146 = vadd.f32 %v131, %v145
    %v147 = vrot.slane %v146, 2
    %v148 = vadd.f32 %v146, %v147
    %v149 = vrot.slane %v148, 1
    %v150 = vadd.f32 %v148, %v149
    %v151 = vrot.slane %v132, 4
    %v152 = vadd.f32 %v132, %v151
    %v153 = vrot.slane %v152, 2
    %v154 = vadd.f32 %v152, %v153
    %v155 = vrot.slane %v154, 1
    %v156 = vadd.f32 %v154, %v155
    %v157 = vmul.f32 %v138, 0.125
    %v158 = vmul.f32 %v144, 0.125
    %v159 = vmul.f32 %v150, 0.125
    %v160 = vmul.f32 %v156, 0.125
    %v161 = vadd.f32 %v157, 1e-05
    %v162 = vadd.f32 %v158, 1e-05
    %v163 = vadd.f32 %v159, 1e-05
    %v164 = vadd.f32 %v160, 1e-05
    %v165 = vrsqrt.pop %v161
    %v166 = vrsqrt.pop %v162
    %v167 = vrsqrt.pop %v163
    %v168 = vrsqrt.pop %v164
    %v169 = vld [vmem:[#allocation8] sm:$0x1]
    %v170 = vmul.f32 %v169, %v165
    %v171 = vmul.f32 %v169, %v166
    %v172 = vmul.f32 %v169, %v167
    %v173 = vmul.f32 %v169, %v168
    %v178 = vlaneseq
    %v179 = vshrl.u32 %v178, 7
    %v180 = vsub.s32 0, %v179
    %v181 = vrot.slane %v170, %v180
    %v182 = vlaneseq
    %v183 = vshrl.u32 %v182, 7
    %v184 = vsub.s32 0, %v183
    %v185 = vrot.slane %v171, %v184
    %v186 = vlaneseq
    %v187 = vshrl.u32 %v186, 7
    %v188 = vsub.s32 0, %v187
    %v189 = vrot.slane %v172, %v188
    %v190 = vlaneseq
    %v191 = vshrl.u32 %v190, 7
    %v192 = vsub.s32 0, %v191
    %v193 = vrot.slane %v173, %v192
    %v198 = vmul.f32 %v125, %v181
    %v199 = vmul.f32 %v126, %v185
    %v200 = vmul.f32 %v127, %v189
    %v201 = vmul.f32 %v128, %v193
    %v202 = vld [vmem:[#allocation9] sm:$0x1]
    %v204 = vlaneseq
    %v205 = vshrl.u32 %v204, 7
    %v206 = vsub.s32 0, %v205
    %v207 = vrot.slane %v202, %v206
    %v209 = vadd.f32 %v198, %v207
    %v210 = vadd.f32 %v199, %v207
    %v211 = vadd.f32 %v200, %v207
    %v212 = vadd.f32 %v201, %v207
    %213 = vst [vmem:[#allocation11] sm:$0xff] %v209
    %214 = vst [vmem:[#allocation11 + $0x8] sm:$0xff] %v210
    %215 = vst [vmem:[#allocation11 + $0x10] sm:$0xff] %v211
    %216 = vst [vmem:[#allocation11 + $0x18] sm:$0xff] %v212
    // Predicated region
    $region34: #{tpu_custom_call.1} parent=1 // pred_check
      _
    $region35: #{tpu_custom_call.1} parent=1 // pred_check_branch
      %218 = sbr.rel (0) target = $region37
    $region36: #{tpu_custom_call.1} parent=1 // pred_region
      %s220 = ssub.s32 512, 512
      %221 = vsyncadd [#allocation5], %s220
      %s222 = sshll.u32 [#allocation11], 4
      %s223 = int_to_ptr.vmem [resolvable:$true] %s222
      %228 = dma.vmem_to_hbm [thread:$0]  %s223, 512, %s4, [#allocation5], 128, 128, 8
    $region37: #{tpu_custom_call.1} parent=1 // pred_fallthru
      _
    // Predicated region
    $region38: #{tpu_custom_call.1} parent=1 // pred_check
      _
    $region39: #{tpu_custom_call.1} parent=1 // pred_check_branch
      %230 = sbr.rel (0) target = $region41
    $region40: #{tpu_custom_call.1} parent=1 // pred_region
      %231 = dma.done [#allocation5], 512
    $region41: #{tpu_custom_call.1} parent=1 // pred_fallthru
      _
    %232 = vsyncpa [#allocation4], 1
    %233 = vsyncpa [#allocation7], 1
    %234 = vsyncpa [#allocation10], 1
    %235 = vsyncpa [#allocation5], 1

</llo_original>
